<compile_context>
chip_gen: v5e
topology: v5e:2x2
jax: 0.10.0
libtpu: 0.0.40
codegen_flags: <defaults>
</compile_context>

<pallas_src>
import jax
import jax.numpy as jnp
from jax.experimental import pallas as pl
from jax.experimental.pallas import tpu as pltpu


# -----------------------------------------------------------------------------
# Fused Pallas kernel
# -----------------------------------------------------------------------------
def _fused_kernel(u_ref, mp_ref, wp_ref, adj_ref,
                  w1u_ref, w2u_ref, bu_ref,
                  w1v_ref, w2v_ref, bv_ref,
                  out_u_ref, out_v_ref):
    u = u_ref[...]                      # (nu, h)
    mp = mp_ref[...]                    # (nv, h)
    wp = wp_ref[...]                    # (nv, h)
    nu, h = u.shape
    nv = mp.shape[0]
    i1, i2 = nu + nv, nu + 2 * nv

    adj = adj_ref[...]                  # (nu+2nv, nu+2nv), loaded once
    amu = adj[0:nu, nu:i1]              # (nu, nv)
    awu = adj[0:nu, i1:i2]              # (nu, nv)
    aum = adj[nu:i1, 0:nu]              # (nv, nu)
    auw = adj[i1:i2, 0:nu]              # (nv, nu)

    dot = lambda a, b: jnp.dot(a, b, preferred_element_type=jnp.float32)
    eps = jnp.float32(0.001)

    # ---- shared raw adjacency-feature products (each computed once) ----
    p_m = dot(amu, mp)                  # (nu, h)
    p_w = dot(awu, wp)                  # (nu, h)
    q_m = dot(aum, u)                   # (nv, h)
    q_w = dot(auw, u)                   # (nv, h)

    colsum_mp = jnp.sum(mp, axis=0, keepdims=True)      # (1, h)
    colsum_wp = jnp.sum(wp, axis=0, keepdims=True)      # (1, h)
    colsum_u = jnp.sum(u, axis=0, keepdims=True)        # (1, h)

    # Deferred row normalization: (adj + eps) / rowsum applied to the (rows, h)
    # results instead of materializing normalized adjacency copies.
    inv_mu = pl.reciprocal(jnp.sum(amu, axis=1, keepdims=True) + eps * nv,
                           approx=True)                  # (nu, 1)
    inv_wu = pl.reciprocal(jnp.sum(awu, axis=1, keepdims=True) + eps * nv,
                           approx=True)
    inv_um = pl.reciprocal(jnp.sum(aum, axis=1, keepdims=True) + eps * nu,
                           approx=True)                  # (nv, 1)
    inv_uw = pl.reciprocal(jnp.sum(auw, axis=1, keepdims=True) + eps * nu,
                           approx=True)

    msg_mp_u = (p_m + eps * colsum_mp) * inv_mu          # (nu, h)
    msg_wp_u = (p_w + eps * colsum_wp) * inv_wu          # (nu, h)
    msg_u_mp = (q_m + eps * colsum_u) * inv_um           # (nv, h)
    msg_u_wp = (q_w + eps * colsum_u) * inv_uw           # (nv, h)

    # Hyper mp<-mp / wp<-wp: reassociated and sharing p_m / p_w.
    msg_mp_mp = dot(aum, p_m)                            # (nv, h)
    msg_wp_wp = dot(auw, p_w)                            # (nv, h)

    # Hyper u<-u: 1 - (1-X)(1-Y) == X + Y - X*Y  (3 VALU ops / element).
    x_uu = dot(amu, aum)                                 # (nu, nu)
    y_uu = dot(awu, auw)                                 # (nu, nu)
    a_uu = x_uu + y_uu - x_uu * y_uu
    msg_u_u = dot(a_uu, u)                               # (nu, h)

    # ---- u-target group: packed weights, columns [mp_u | wp_u | u_u] ----
    msgs_u = jnp.concatenate([msg_mp_u, msg_wp_u, msg_u_u], axis=1)   # (nu, 3h)
    tu = dot(u, w1u_ref[...]) + dot(msgs_u, w2u_ref[...]) + bu_ref[...]
    su = jax.nn.sigmoid(tu)                                           # (nu, 3h)
    new_u = (su[:, 0:h] + su[:, h:2 * h]) * jnp.float32(0.5)
    # Lane-dense (nu, 4h = 128) store: [new_u | mp_u | wp_u | u_u].
    out_u_ref[...] = jnp.concatenate([new_u, su], axis=1)

    # ---- mp/wp-target group: columns [u_mp | mp_mp | u_wp | wp_wp] ----
    x_v = jnp.concatenate([mp, wp], axis=1)                           # (nv, 2h)
    msgs_v = jnp.concatenate([msg_u_mp, msg_mp_mp, msg_u_wp, msg_wp_wp],
                             axis=1)                                  # (nv, 4h)
    tv = dot(x_v, w1v_ref[...]) + dot(msgs_v, w2v_ref[...]) + bv_ref[...]
    # Lane-dense (nv, 4h = 128) store.
    out_v_ref[...] = jax.nn.sigmoid(tv)


def _fused_call(u, mp, wp, adj, w1u, w2u, bu, w1v, w2v, bv):
    nu, h = u.shape
    nv = mp.shape[0]

    # Advisory cost estimate (matmul MACs*2, sigmoid/recip transcendentals).
    macs = (2 * nu * nv * h          # p_m, p_w
            + 2 * nv * nu * h        # q_m, q_w
            + 2 * nv * nu * h        # msg_mp_mp, msg_wp_wp
            + 2 * nu * nv * nu       # x_uu, y_uu
            + nu * nu * h            # a_uu @ u
            + nu * h * 3 * h + nu * 3 * h * 3 * h      # u-group weight matmuls
            + nv * 2 * h * 4 * h + nv * 4 * h * 4 * h) # v-group weight matmuls
    trans = nu * 3 * h + nv * 4 * h + 2 * nu + 2 * nv
    in_arrays = (u, mp, wp, adj, w1u, w2u, bu, w1v, w2v, bv)
    bytes_acc = sum(a.size * a.dtype.itemsize for a in in_arrays) \
        + (nu * 4 * h + nv * 4 * h) * 4

    vmem = lambda: pl.BlockSpec(memory_space=pltpu.MemorySpace.VMEM)
    return pl.pallas_call(
        _fused_kernel,
        out_shape=(jax.ShapeDtypeStruct((nu, 4 * h), jnp.float32),
                   jax.ShapeDtypeStruct((nv, 4 * h), jnp.float32)),
        in_specs=[vmem() for _ in range(10)],
        out_specs=(vmem(), vmem()),
        compiler_params=pltpu.CompilerParams(vmem_limit_bytes=32 * 1024 * 1024),
        cost_estimate=pl.CostEstimate(flops=2 * macs, transcendentals=trans,
                                      bytes_accessed=bytes_acc),
    )(u, mp, wp, adj, w1u, w2u, bu, w1v, w2v, bv)


# -----------------------------------------------------------------------------
# Parameter init (matches nn.init.xavier_uniform_ with gain=1.414)
# -----------------------------------------------------------------------------
def xavier_uniform(key, d1, d2, gain=1.414):
    limit = gain * (6.0 / (d1 + d2)) ** 0.5
    return jax.random.uniform(key, (d1, d2), jnp.float32, -limit, limit)


def init_params(key, hid_dim):
    names = [
        "W_mp_u", "W_wp_u", "W_u_mp", "W_u_wp",
        "W_u_u_hyper", "W_mp_mp_hyper", "W_wp_wp_hyper",
    ]
    params = {}
    keys = jax.random.split(key, len(names) * 3)
    ki = 0
    for name in names:
        params[name + "_1"] = xavier_uniform(keys[ki], hid_dim, hid_dim); ki += 1
        params[name + "_2"] = xavier_uniform(keys[ki], hid_dim, hid_dim); ki += 1
        params[name + "_3"] = xavier_uniform(keys[ki], 1, hid_dim); ki += 1
    return params


# -----------------------------------------------------------------------------
# One-time weight packing (hoisted out of the per-step jitted forward)
# -----------------------------------------------------------------------------
def pack_params(params):
    bd = jax.scipy.linalg.block_diag
    packed = {}
    # u-target group: mp->u, wp->u, u->u (all share LHS = u for the W1 term).
    packed["w1u"] = jnp.concatenate(
        [params["W_mp_u_1"], params["W_wp_u_1"], params["W_u_u_hyper_1"]],
        axis=1)                                                        # (h, 3h)
    packed["w2u"] = bd(params["W_mp_u_2"], params["W_wp_u_2"],
                       params["W_u_u_hyper_2"])                        # (3h, 3h)
    packed["bu"] = jnp.concatenate(
        [params["W_mp_u_3"], params["W_wp_u_3"], params["W_u_u_hyper_3"]],
        axis=1)                                                        # (1, 3h)
    # mp/wp-target group: u->mp, mp->mp, u->wp, wp->wp.
    packed["w1v"] = bd(
        jnp.concatenate([params["W_u_mp_1"], params["W_mp_mp_hyper_1"]], axis=1),
        jnp.concatenate([params["W_u_wp_1"], params["W_wp_wp_hyper_1"]], axis=1),
    )                                                                  # (2h, 4h)
    packed["w2v"] = bd(params["W_u_mp_2"], params["W_mp_mp_hyper_2"],
                       params["W_u_wp_2"], params["W_wp_wp_hyper_2"])  # (4h, 4h)
    packed["bv"] = jnp.concatenate(
        [params["W_u_mp_3"], params["W_mp_mp_hyper_3"],
         params["W_u_wp_3"], params["W_wp_wp_hyper_3"]], axis=1)       # (1, 4h)
    return jax.tree_util.tree_map(jnp.asarray, packed)


# -----------------------------------------------------------------------------
# Forward pass: single fused kernel call, outputs split in the wrapper
# -----------------------------------------------------------------------------
@jax.jit
def wsbignn_forward(packed, u, mp, wp, adj):
    h = u.shape[1]
    out_u, out_v = _fused_call(u, mp, wp, adj,
                               packed["w1u"], packed["w2u"], packed["bu"],
                               packed["w1v"], packed["w2v"], packed["bv"])
    new_u = out_u[:, 0:h]
    u_u = out_u[:, 3 * h:4 * h]
    u_mp = out_v[:, 0:h]
    mp_mp = out_v[:, h:2 * h]
    u_wp = out_v[:, 2 * h:3 * h]
    wp_wp = out_v[:, 3 * h:4 * h]
    return new_u, u_mp, u_wp, u_u, mp_mp, wp_wp


# -----------------------------------------------------------------------------
# Pure-JAX reference (correctness sanity check, mirrors the PyTorch module)
# -----------------------------------------------------------------------------
def wsbignn_reference(params, u, mp, wp, adj):
    nu, nv = u.shape[0], mp.shape[0]
    i1, i2 = nu + nv, nu + 2 * nv

    def norm(a):
        a = a + 0.001
        return a / a.sum(axis=1, keepdims=True)

    dot = lambda a, b: jnp.dot(a, b, preferred_element_type=jnp.float32)
    sig = jax.nn.sigmoid

    adj_mu, adj_wu = adj[0:nu, nu:i1], adj[0:nu, i1:i2]
    adj_um, adj_uw = adj[nu:i1, 0:nu], adj[i1:i2, 0:nu]

    mp_u = sig(dot(u, params["W_mp_u_1"])
               + dot(dot(norm(adj_mu), mp), params["W_mp_u_2"])
               + params["W_mp_u_3"])
    wp_u = sig(dot(u, params["W_wp_u_1"])
               + dot(dot(norm(adj_wu), wp), params["W_wp_u_2"])
               + params["W_wp_u_3"])
    new_u = (mp_u + wp_u) / 2.0

    a_uu = 1.0 - (1.0 - dot(adj_mu, adj_um)) * (1.0 - dot(adj_wu, adj_uw))
    u_u = sig(dot(u, params["W_u_u_hyper_1"])
              + dot(dot(a_uu, u), params["W_u_u_hyper_2"])
              + params["W_u_u_hyper_3"])

    u_mp = sig(dot(mp, params["W_u_mp_1"])
               + dot(dot(norm(adj_um), u), params["W_u_mp_2"])
               + params["W_u_mp_3"])
    mp_mp = sig(dot(mp, params["W_mp_mp_hyper_1"])
                + dot(dot(dot(adj_um, adj_mu), mp), params["W_mp_mp_hyper_2"])
                + params["W_mp_mp_hyper_3"])

    u_wp = sig(dot(wp, params["W_u_wp_1"])
               + dot(dot(norm(adj_uw), u), params["W_u_wp_2"])
               + params["W_u_wp_3"])
    wp_wp = sig(dot(wp, params["W_wp_wp_hyper_1"])
                + dot(dot(dot(adj_uw, adj_wu), wp), params["W_wp_wp_hyper_2"])
                + params["W_wp_wp_hyper_3"])

    return new_u, u_mp, u_wp, u_u, mp_mp, wp_wp


# -----------------------------------------------------------------------------
if __name__ == "__main__":
    hid_dim = 32
    nu, nv = 16, 8

    key = jax.random.PRNGKey(0)
    k_params, k_u, k_mp, k_wp, k_adj = jax.random.split(key, 5)

    params = init_params(k_params, hid_dim)
    packed = pack_params(params)          # one-time weight packing (not per call)

    u = jax.random.normal(k_u, (nu, hid_dim), jnp.float32)
    mp = jax.random.normal(k_mp, (nv, hid_dim), jnp.float32)
    wp = jax.random.normal(k_wp, (nv, hid_dim), jnp.float32)
    # Non-negative adjacency (like a 0/1 bipartite graph with soft weights).
    adj = jax.random.uniform(k_adj, (nu + 2 * nv, nu + 2 * nv), jnp.float32)

    outs = wsbignn_forward(packed, u, mp, wp, adj)
    outs = jax.block_until_ready(outs)

    refs = wsbignn_reference(params, u, mp, wp, adj)
    for o, r in zip(outs, refs):
        assert o.shape == r.shape and o.dtype == jnp.float32
        assert jnp.max(jnp.abs(o - r)) < 5e-3

    print("KERNEL_OK")
</pallas_src>

<mosaic_0001>
module attributes {stable_mosaic.version = 11 : i64} {
  func.func @_fused_kernel(%arg0: memref<16x32xf32, #tpu.memory_space<vmem>>, %arg1: memref<8x32xf32, #tpu.memory_space<vmem>>, %arg2: memref<8x32xf32, #tpu.memory_space<vmem>>, %arg3: memref<32x32xf32, #tpu.memory_space<vmem>>, %arg4: memref<32x96xf32, #tpu.memory_space<vmem>>, %arg5: memref<96x96xf32, #tpu.memory_space<vmem>>, %arg6: memref<1x96xf32, #tpu.memory_space<vmem>>, %arg7: memref<64x128xf32, #tpu.memory_space<vmem>>, %arg8: memref<128x128xf32, #tpu.memory_space<vmem>>, %arg9: memref<1x128xf32, #tpu.memory_space<vmem>>, %arg10: memref<16x128xf32, #tpu.memory_space<vmem>>, %arg11: memref<8x128xf32, #tpu.memory_space<vmem>>) attributes {dimension_semantics = [], scalar_prefetch = 0 : i64, scratch_operands = 0 : i64, tpu.core_type = #tpu.core_type<tc>} {
    %c0 = arith.constant 0 : index
    %c0_0 = arith.constant 0 : index
    %0 = vector.load %arg0[%c0, %c0_0] : memref<16x32xf32, #tpu.memory_space<vmem>>, vector<16x32xf32>
    %c0_1 = arith.constant 0 : index
    %c0_2 = arith.constant 0 : index
    %1 = vector.load %arg1[%c0_1, %c0_2] : memref<8x32xf32, #tpu.memory_space<vmem>>, vector<8x32xf32>
    %c0_3 = arith.constant 0 : index
    %c0_4 = arith.constant 0 : index
    %2 = vector.load %arg2[%c0_3, %c0_4] : memref<8x32xf32, #tpu.memory_space<vmem>>, vector<8x32xf32>
    %c0_5 = arith.constant 0 : index
    %c0_6 = arith.constant 0 : index
    %3 = vector.load %arg3[%c0_5, %c0_6] : memref<32x32xf32, #tpu.memory_space<vmem>>, vector<32x32xf32>
    %4 = vector.extract_strided_slice %3 {offsets = [0, 16], sizes = [16, 8], strides = [1, 1]} : vector<32x32xf32> to vector<16x8xf32>
    %5 = vector.extract_strided_slice %3 {offsets = [0, 24], sizes = [16, 8], strides = [1, 1]} : vector<32x32xf32> to vector<16x8xf32>
    %6 = vector.extract_strided_slice %3 {offsets = [16, 0], sizes = [8, 16], strides = [1, 1]} : vector<32x32xf32> to vector<8x16xf32>
    %7 = vector.extract_strided_slice %3 {offsets = [24, 0], sizes = [8, 16], strides = [1, 1]} : vector<32x32xf32> to vector<8x16xf32>
    %cst = arith.constant dense<0.000000e+00> : vector<16x32xf32>
    %8 = tpu.matmul %4, %1, %cst {dimension_numbers = #tpu.dot_dimension_numbers<[1], [0], [0], [1], [0, 0, 1, 1], [], []>} : vector<16x8xf32>, vector<8x32xf32>, vector<16x32xf32> -> vector<16x32xf32>
    %cst_7 = arith.constant dense<0.000000e+00> : vector<16x32xf32>
    %9 = tpu.matmul %5, %2, %cst_7 {dimension_numbers = #tpu.dot_dimension_numbers<[1], [0], [0], [1], [0, 0, 1, 1], [], []>} : vector<16x8xf32>, vector<8x32xf32>, vector<16x32xf32> -> vector<16x32xf32>
    %cst_8 = arith.constant dense<0.000000e+00> : vector<8x32xf32>
    %10 = tpu.matmul %6, %0, %cst_8 {dimension_numbers = #tpu.dot_dimension_numbers<[1], [0], [0], [1], [0, 0, 1, 1], [], []>} : vector<8x16xf32>, vector<16x32xf32>, vector<8x32xf32> -> vector<8x32xf32>
    %cst_9 = arith.constant dense<0.000000e+00> : vector<8x32xf32>
    %11 = tpu.matmul %7, %0, %cst_9 {dimension_numbers = #tpu.dot_dimension_numbers<[1], [0], [0], [1], [0, 0, 1, 1], [], []>} : vector<8x16xf32>, vector<16x32xf32>, vector<8x32xf32> -> vector<8x32xf32>
    %cst_10 = arith.constant dense<0.000000e+00> : vector<32xf32>
    %12 = vector.multi_reduction <add>, %1, %cst_10 [0] : vector<8x32xf32> to vector<32xf32>
    %13 = vector.shape_cast %12 : vector<32xf32> to vector<1x32xf32>
    %cst_11 = arith.constant dense<0.000000e+00> : vector<32xf32>
    %14 = vector.multi_reduction <add>, %2, %cst_11 [0] : vector<8x32xf32> to vector<32xf32>
    %15 = vector.shape_cast %14 : vector<32xf32> to vector<1x32xf32>
    %cst_12 = arith.constant dense<0.000000e+00> : vector<32xf32>
    %16 = vector.multi_reduction <add>, %0, %cst_12 [0] : vector<16x32xf32> to vector<32xf32>
    %17 = vector.shape_cast %16 : vector<32xf32> to vector<1x32xf32>
    %cst_13 = arith.constant dense<0.000000e+00> : vector<16xf32>
    %18 = vector.multi_reduction <add>, %4, %cst_13 [1] : vector<16x8xf32> to vector<16xf32>
    %19 = vector.shape_cast %18 : vector<16xf32> to vector<16x1xf32>
    %cst_14 = arith.constant 1.000000e-03 : f32
    %cst_15 = arith.constant 8.000000e+00 : f32
    %20 = arith.mulf %cst_14, %cst_15 : f32
    %21 = vector.broadcast %20 : f32 to vector<16x1xf32>
    %22 = arith.addf %19, %21 : vector<16x1xf32>
    %23 = tpu.reciprocal %22 {approx = true} : vector<16x1xf32> -> vector<16x1xf32>
    %cst_16 = arith.constant dense<0.000000e+00> : vector<16xf32>
    %24 = vector.multi_reduction <add>, %5, %cst_16 [1] : vector<16x8xf32> to vector<16xf32>
    %25 = vector.shape_cast %24 : vector<16xf32> to vector<16x1xf32>
    %cst_17 = arith.constant 1.000000e-03 : f32
    %cst_18 = arith.constant 8.000000e+00 : f32
    %26 = arith.mulf %cst_17, %cst_18 : f32
    %27 = vector.broadcast %26 : f32 to vector<16x1xf32>
    %28 = arith.addf %25, %27 : vector<16x1xf32>
    %29 = tpu.reciprocal %28 {approx = true} : vector<16x1xf32> -> vector<16x1xf32>
    %cst_19 = arith.constant dense<0.000000e+00> : vector<8xf32>
    %30 = vector.multi_reduction <add>, %6, %cst_19 [1] : vector<8x16xf32> to vector<8xf32>
    %31 = vector.shape_cast %30 : vector<8xf32> to vector<8x1xf32>
    %cst_20 = arith.constant 1.000000e-03 : f32
    %cst_21 = arith.constant 1.600000e+01 : f32
    %32 = arith.mulf %cst_20, %cst_21 : f32
    %33 = vector.broadcast %32 : f32 to vector<8x1xf32>
    %34 = arith.addf %31, %33 : vector<8x1xf32>
    %35 = tpu.reciprocal %34 {approx = true} : vector<8x1xf32> -> vector<8x1xf32>
    %cst_22 = arith.constant dense<0.000000e+00> : vector<8xf32>
    %36 = vector.multi_reduction <add>, %7, %cst_22 [1] : vector<8x16xf32> to vector<8xf32>
    %37 = vector.shape_cast %36 : vector<8xf32> to vector<8x1xf32>
    %cst_23 = arith.constant 1.000000e-03 : f32
    %cst_24 = arith.constant 1.600000e+01 : f32
    %38 = arith.mulf %cst_23, %cst_24 : f32
    %39 = vector.broadcast %38 : f32 to vector<8x1xf32>
    %40 = arith.addf %37, %39 : vector<8x1xf32>
    %41 = tpu.reciprocal %40 {approx = true} : vector<8x1xf32> -> vector<8x1xf32>
    %cst_25 = arith.constant 1.000000e-03 : f32
    %42 = vector.broadcast %cst_25 : f32 to vector<1x32xf32>
    %43 = arith.mulf %42, %13 : vector<1x32xf32>
    %44 = vector.broadcast %43 : vector<1x32xf32> to vector<16x32xf32>
    %45 = arith.addf %8, %44 : vector<16x32xf32>
    %46 = vector.broadcast %23 : vector<16x1xf32> to vector<16x32xf32>
    %47 = arith.mulf %45, %46 : vector<16x32xf32>
    %cst_26 = arith.constant 1.000000e-03 : f32
    %48 = vector.broadcast %cst_26 : f32 to vector<1x32xf32>
    %49 = arith.mulf %48, %15 : vector<1x32xf32>
    %50 = vector.broadcast %49 : vector<1x32xf32> to vector<16x32xf32>
    %51 = arith.addf %9, %50 : vector<16x32xf32>
    %52 = vector.broadcast %29 : vector<16x1xf32> to vector<16x32xf32>
    %53 = arith.mulf %51, %52 : vector<16x32xf32>
    %cst_27 = arith.constant 1.000000e-03 : f32
    %54 = vector.broadcast %cst_27 : f32 to vector<1x32xf32>
    %55 = arith.mulf %54, %17 : vector<1x32xf32>
    %56 = vector.broadcast %55 : vector<1x32xf32> to vector<8x32xf32>
    %57 = arith.addf %10, %56 : vector<8x32xf32>
    %58 = vector.broadcast %35 : vector<8x1xf32> to vector<8x32xf32>
    %59 = arith.mulf %57, %58 : vector<8x32xf32>
    %cst_28 = arith.constant 1.000000e-03 : f32
    %60 = vector.broadcast %cst_28 : f32 to vector<1x32xf32>
    %61 = arith.mulf %60, %17 : vector<1x32xf32>
    %62 = vector.broadcast %61 : vector<1x32xf32> to vector<8x32xf32>
    %63 = arith.addf %11, %62 : vector<8x32xf32>
    %64 = vector.broadcast %41 : vector<8x1xf32> to vector<8x32xf32>
    %65 = arith.mulf %63, %64 : vector<8x32xf32>
    %cst_29 = arith.constant dense<0.000000e+00> : vector<8x32xf32>
    %66 = tpu.matmul %6, %8, %cst_29 {dimension_numbers = #tpu.dot_dimension_numbers<[1], [0], [0], [1], [0, 0, 1, 1], [], []>} : vector<8x16xf32>, vector<16x32xf32>, vector<8x32xf32> -> vector<8x32xf32>
    %cst_30 = arith.constant dense<0.000000e+00> : vector<8x32xf32>
    %67 = tpu.matmul %7, %9, %cst_30 {dimension_numbers = #tpu.dot_dimension_numbers<[1], [0], [0], [1], [0, 0, 1, 1], [], []>} : vector<8x16xf32>, vector<16x32xf32>, vector<8x32xf32> -> vector<8x32xf32>
    %cst_31 = arith.constant dense<0.000000e+00> : vector<16x16xf32>
    %68 = tpu.matmul %4, %6, %cst_31 {dimension_numbers = #tpu.dot_dimension_numbers<[1], [0], [0], [1], [0, 0, 1, 1], [], []>} : vector<16x8xf32>, vector<8x16xf32>, vector<16x16xf32> -> vector<16x16xf32>
    %cst_32 = arith.constant dense<0.000000e+00> : vector<16x16xf32>
    %69 = tpu.matmul %5, %7, %cst_32 {dimension_numbers = #tpu.dot_dimension_numbers<[1], [0], [0], [1], [0, 0, 1, 1], [], []>} : vector<16x8xf32>, vector<8x16xf32>, vector<16x16xf32> -> vector<16x16xf32>
    %70 = arith.addf %68, %69 : vector<16x16xf32>
    %71 = arith.mulf %68, %69 : vector<16x16xf32>
    %72 = arith.subf %70, %71 : vector<16x16xf32>
    %cst_33 = arith.constant dense<0.000000e+00> : vector<16x32xf32>
    %73 = tpu.matmul %72, %0, %cst_33 {dimension_numbers = #tpu.dot_dimension_numbers<[1], [0], [0], [1], [0, 0, 1, 1], [], []>} : vector<16x16xf32>, vector<16x32xf32>, vector<16x32xf32> -> vector<16x32xf32>
    %74 = tpu.concatenate %47, %53, %73 in 1 : vector<16x32xf32>, vector<16x32xf32>, vector<16x32xf32> -> vector<16x96xf32>
    %c0_34 = arith.constant 0 : index
    %c0_35 = arith.constant 0 : index
    %75 = vector.load %arg4[%c0_34, %c0_35] : memref<32x96xf32, #tpu.memory_space<vmem>>, vector<32x96xf32>
    %cst_36 = arith.constant dense<0.000000e+00> : vector<16x96xf32>
    %76 = tpu.matmul %0, %75, %cst_36 {dimension_numbers = #tpu.dot_dimension_numbers<[1], [0], [0], [1], [0, 0, 1, 1], [], []>} : vector<16x32xf32>, vector<32x96xf32>, vector<16x96xf32> -> vector<16x96xf32>
    %c0_37 = arith.constant 0 : index
    %c0_38 = arith.constant 0 : index
    %77 = vector.load %arg5[%c0_37, %c0_38] : memref<96x96xf32, #tpu.memory_space<vmem>>, vector<96x96xf32>
    %cst_39 = arith.constant dense<0.000000e+00> : vector<16x96xf32>
    %78 = tpu.matmul %74, %77, %cst_39 {dimension_numbers = #tpu.dot_dimension_numbers<[1], [0], [0], [1], [0, 0, 1, 1], [], []>} : vector<16x96xf32>, vector<96x96xf32>, vector<16x96xf32> -> vector<16x96xf32>
    %79 = arith.addf %76, %78 : vector<16x96xf32>
    %c0_40 = arith.constant 0 : index
    %c0_41 = arith.constant 0 : index
    %80 = vector.load %arg6[%c0_40, %c0_41] : memref<1x96xf32, #tpu.memory_space<vmem>>, vector<1x96xf32>
    %81 = vector.broadcast %80 : vector<1x96xf32> to vector<16x96xf32>
    %82 = arith.addf %79, %81 : vector<16x96xf32>
    %83 = arith.negf %82 : vector<16x96xf32>
    %84 = math.exp %83 : vector<16x96xf32>
    %cst_42 = arith.constant 1.000000e+00 : f32
    %85 = vector.broadcast %cst_42 : f32 to vector<16x96xf32>
    %86 = arith.addf %85, %84 : vector<16x96xf32>
    %87 = arith.divf %85, %86 : vector<16x96xf32>
    %88 = vector.extract_strided_slice %87 {offsets = [0, 0], sizes = [16, 32], strides = [1, 1]} : vector<16x96xf32> to vector<16x32xf32>
    %89 = vector.extract_strided_slice %87 {offsets = [0, 32], sizes = [16, 32], strides = [1, 1]} : vector<16x96xf32> to vector<16x32xf32>
    %90 = arith.addf %88, %89 : vector<16x32xf32>
    %cst_43 = arith.constant 5.000000e-01 : f32
    %91 = vector.broadcast %cst_43 : f32 to vector<16x32xf32>
    %92 = arith.mulf %90, %91 : vector<16x32xf32>
    %93 = tpu.concatenate %92, %87 in 1 : vector<16x32xf32>, vector<16x96xf32> -> vector<16x128xf32>
    %c0_44 = arith.constant 0 : index
    %c0_45 = arith.constant 0 : index
    %94 = vector.load %arg10[%c0_44, %c0_45] : memref<16x128xf32, #tpu.memory_space<vmem>>, vector<16x128xf32>
    tpu.vector_store %arg10[%c0_44, %c0_45], %93 {strides = array<i32>} : memref<16x128xf32, #tpu.memory_space<vmem>>, vector<16x128xf32>,
    %95 = tpu.concatenate %1, %2 in 1 : vector<8x32xf32>, vector<8x32xf32> -> vector<8x64xf32>
    %96 = tpu.concatenate %59, %66, %65, %67 in 1 : vector<8x32xf32>, vector<8x32xf32>, vector<8x32xf32>, vector<8x32xf32> -> vector<8x128xf32>
    %c0_46 = arith.constant 0 : index
    %c0_47 = arith.constant 0 : index
    %97 = vector.load %arg7[%c0_46, %c0_47] : memref<64x128xf32, #tpu.memory_space<vmem>>, vector<64x128xf32>
    %cst_48 = arith.constant dense<0.000000e+00> : vector<8x128xf32>
    %98 = tpu.matmul %95, %97, %cst_48 {dimension_numbers = #tpu.dot_dimension_numbers<[1], [0], [0], [1], [0, 0, 1, 1], [], []>} : vector<8x64xf32>, vector<64x128xf32>, vector<8x128xf32> -> vector<8x128xf32>
    %c0_49 = arith.constant 0 : index
    %c0_50 = arith.constant 0 : index
    %99 = vector.load %arg8[%c0_49, %c0_50] : memref<128x128xf32, #tpu.memory_space<vmem>>, vector<128x128xf32>
    %cst_51 = arith.constant dense<0.000000e+00> : vector<8x128xf32>
    %100 = tpu.matmul %96, %99, %cst_51 {dimension_numbers = #tpu.dot_dimension_numbers<[1], [0], [0], [1], [0, 0, 1, 1], [], []>} : vector<8x128xf32>, vector<128x128xf32>, vector<8x128xf32> -> vector<8x128xf32>
    %101 = arith.addf %98, %100 : vector<8x128xf32>
    %c0_52 = arith.constant 0 : index
    %c0_53 = arith.constant 0 : index
    %102 = vector.load %arg9[%c0_52, %c0_53] : memref<1x128xf32, #tpu.memory_space<vmem>>, vector<1x128xf32>
    %103 = vector.broadcast %102 : vector<1x128xf32> to vector<8x128xf32>
    %104 = arith.addf %101, %103 : vector<8x128xf32>
    %105 = arith.negf %104 : vector<8x128xf32>
    %106 = math.exp %105 : vector<8x128xf32>
    %cst_54 = arith.constant 1.000000e+00 : f32
    %107 = vector.broadcast %cst_54 : f32 to vector<8x128xf32>
    %108 = arith.addf %107, %106 : vector<8x128xf32>
    %109 = arith.divf %107, %108 : vector<8x128xf32>
    %c0_55 = arith.constant 0 : index
    %c0_56 = arith.constant 0 : index
    %110 = vector.load %arg11[%c0_55, %c0_56] : memref<8x128xf32, #tpu.memory_space<vmem>>, vector<8x128xf32>
    tpu.vector_store %arg11[%c0_55, %c0_56], %109 {strides = array<i32>} : memref<8x128xf32, #tpu.memory_space<vmem>>, vector<8x128xf32>,
    return
  }
}

</mosaic_0001>

<llo_original>
// kernel: wsbignn_forward.1
$region0: #{wsbignn_forward.1}
  #allocation0 [shape = 'u32[]', space=smem, size = 0x4, offset = 0x4, fixed_abs, tag = 'smem constant byte address 0x4 - core index']
  #allocation1 [shape = 'u32[72,128]{1,0:T(1,128)}', space=vmem, size = 0x9000, scoped, tag = 'internal scratch']
  %s0 = inlined_call_operand.hbm [shape: f32[16,32], index: 0, kind: input, shape index: {}]
  %s1 = inlined_call_operand.hbm [shape: f32[8,32], index: 1, kind: input, shape index: {}]
  %s2 = inlined_call_operand.hbm [shape: f32[8,32], index: 2, kind: input, shape index: {}]
  %s3 = inlined_call_operand.hbm [shape: f32[32,32], index: 3, kind: input, shape index: {}]
  %s4 = inlined_call_operand.hbm [shape: f32[32,96], index: 4, kind: input, shape index: {}]
  %s5 = inlined_call_operand.hbm [shape: f32[96,96], index: 5, kind: input, shape index: {}]
  %s6 = inlined_call_operand.hbm [shape: f32[1,96], index: 6, kind: input, shape index: {}]
  %s7 = inlined_call_operand.hbm [shape: f32[64,128], index: 7, kind: input, shape index: {}]
  %s8 = inlined_call_operand.hbm [shape: f32[128,128], index: 8, kind: input, shape index: {}]
  %s9 = inlined_call_operand.hbm [shape: f32[1,128], index: 9, kind: input, shape index: {}]
  %s10 = inlined_call_operand.vmem [shape: f32[16,128], index: 10, kind: output, shape index: {0}]
  %s11 = inlined_call_operand.vmem [shape: f32[8,128], index: 11, kind: output, shape index: {1}]
  %12 = xla_tuple %s10, %s11
  %s13 = sld [smem:[#allocation0]]
  $region98: #{wsbignn_forward.1} parent=0
    _
  %s15 = ssub.s32 1, %s13
  %s16 = scalar_select 0, %s15, %s13
  $region1: #{wsbignn_forward.1} parent=0
    #allocation2 [shape = 'u8[8192]{0}', space=vmem, size = 0x2000, scoped, tag = 'input window, operand 0, single buffered']
    #allocation3 [shape = 's32[1]{0}', space=sflag, size = 0x4, scoped, tag = 'scoped memory for wsbignn_forward.1']
    #allocation4 [shape = 'u8[4096]{0}', space=vmem, size = 0x1000, scoped, tag = 'input window, operand 1, single buffered']
    #allocation5 [shape = 's32[1]{0}', space=sflag, size = 0x4, scoped, tag = 'scoped memory for wsbignn_forward.1']
    #allocation6 [shape = 'u8[4096]{0}', space=vmem, size = 0x1000, scoped, tag = 'input window, operand 2, single buffered']
    #allocation7 [shape = 'u8[16384]{0}', space=vmem, size = 0x4000, scoped, tag = 'input window, operand 3, single buffered']
    #allocation8 [shape = 's32[1]{0}', space=sflag, size = 0x4, scoped, tag = 'scoped memory for wsbignn_forward.1']
    #allocation9 [shape = 'u8[16384]{0}', space=vmem, size = 0x4000, scoped, tag = 'input window, operand 4, single buffered']
    #allocation10 [shape = 'u8[49152]{0}', space=vmem, size = 0xc000, scoped, tag = 'input window, operand 5, single buffered']
    #allocation11 [shape = 's32[1]{0}', space=sflag, size = 0x4, scoped, tag = 'scoped memory for wsbignn_forward.1']
    #allocation12 [shape = 'u8[512]{0}', space=vmem, size = 0x400, scoped, tag = 'input window, operand 6, single buffered']
    #allocation13 [shape = 'u8[32768]{0}', space=vmem, size = 0x8000, scoped, tag = 'input window, operand 7, single buffered']
    #allocation14 [shape = 's32[1]{0}', space=sflag, size = 0x4, scoped, tag = 'scoped memory for wsbignn_forward.1']
    #allocation15 [shape = 'u8[65536]{0}', space=vmem, size = 0x10000, scoped, tag = 'input window, operand 8, single buffered']
    #allocation16 [shape = 'u8[512]{0}', space=vmem, size = 0x400, scoped, tag = 'input window, operand 9, single buffered']
    #allocation17 [shape = 's32[1]{0}', space=sflag, size = 0x4, scoped, tag = 'scoped memory for wsbignn_forward.1']
    %17 = vsyncpa [#allocation3], 0
    %18 = vsyncpa [#allocation5], 0
    %19 = vsyncpa [#allocation8], 0
    %20 = vsyncpa [#allocation11], 0
    %21 = vsyncpa [#allocation14], 0
    %22 = vsyncpa [#allocation17], 0
    // Predicated region
    $region2: #{wsbignn_forward.1} parent=1 // pred_check
      _
    $region3: #{wsbignn_forward.1} parent=1 // pred_check_branch
      %24 = sbr.rel (0) target = $region5
    $region4: #{wsbignn_forward.1} parent=1 // pred_region
      %26 = vsyncadd [#allocation3], 0
      %s27 = sshll.u32 %s0, 4
      %s28 = int_to_ptr.hbm [resolvable:$true] %s27
      %s29 = sshll.u32 [#allocation2], 4
      %s30 = int_to_ptr.vmem [resolvable:$true] %s29
      %35 = dma.hbm_to_vmem [thread:$0]  %s28, 256, %s30, [#allocation3], 128, 128, 8
    $region5: #{wsbignn_forward.1} parent=1 // pred_fallthru
      _
    // Predicated region
    $region6: #{wsbignn_forward.1} parent=1 // pred_check
      _
    $region7: #{wsbignn_forward.1} parent=1 // pred_check_branch
      %37 = sbr.rel (0) target = $region9
    $region8: #{wsbignn_forward.1} parent=1 // pred_region
      %39 = vsyncadd [#allocation5], 0
      %s41 = sshll.u32 %s1, 4
      %s42 = int_to_ptr.hbm [resolvable:$true] %s41
      %s43 = sshll.u32 [#allocation4], 4
      %s44 = int_to_ptr.vmem [resolvable:$true] %s43
      %46 = dma.hbm_to_vmem [thread:$0]  %s42, 128, %s44, [#allocation5]
    $region9: #{wsbignn_forward.1} parent=1 // pred_fallthru
      _
    // Predicated region
    $region10: #{wsbignn_forward.1} parent=1 // pred_check
      _
    $region11: #{wsbignn_forward.1} parent=1 // pred_check_branch
      %48 = sbr.rel (0) target = $region13
    $region12: #{wsbignn_forward.1} parent=1 // pred_region
      %50 = vsyncadd [#allocation5], 0
      %s52 = sshll.u32 %s2, 4
      %s53 = int_to_ptr.hbm [resolvable:$true] %s52
      %s54 = sshll.u32 [#allocation6], 4
      %s55 = int_to_ptr.vmem [resolvable:$true] %s54
      %57 = dma.hbm_to_vmem [thread:$0]  %s53, 128, %s55, [#allocation5]
    $region13: #{wsbignn_forward.1} parent=1 // pred_fallthru
      _
    // Predicated region
    $region14: #{wsbignn_forward.1} parent=1 // pred_check
      _
    $region15: #{wsbignn_forward.1} parent=1 // pred_check_branch
      %59 = sbr.rel (0) target = $region17
    $region16: #{wsbignn_forward.1} parent=1 // pred_region
      %61 = vsyncadd [#allocation8], 0
      %s62 = sshll.u32 %s3, 4
      %s63 = int_to_ptr.hbm [resolvable:$true] %s62
      %s64 = sshll.u32 [#allocation7], 4
      %s65 = int_to_ptr.vmem [resolvable:$true] %s64
      %70 = dma.hbm_to_vmem [thread:$0]  %s63, 512, %s65, [#allocation8], 128, 128, 8
    $region17: #{wsbignn_forward.1} parent=1 // pred_fallthru
      _
    // Predicated region
    $region18: #{wsbignn_forward.1} parent=1 // pred_check
      _
    $region19: #{wsbignn_forward.1} parent=1 // pred_check_branch
      %72 = sbr.rel (0) target = $region21
    $region20: #{wsbignn_forward.1} parent=1 // pred_region
      %74 = vsyncadd [#allocation8], 0
      %s75 = sshll.u32 %s4, 4
      %s76 = int_to_ptr.hbm [resolvable:$true] %s75
      %s77 = sshll.u32 [#allocation9], 4
      %s78 = int_to_ptr.vmem [resolvable:$true] %s77
      %83 = dma.hbm_to_vmem [thread:$0]  %s76, 512, %s78, [#allocation8], 128, 128, 8
    $region21: #{wsbignn_forward.1} parent=1 // pred_fallthru
      _
    // Predicated region
    $region22: #{wsbignn_forward.1} parent=1 // pred_check
      _
    $region23: #{wsbignn_forward.1} parent=1 // pred_check_branch
      %85 = sbr.rel (0) target = $region25
    $region24: #{wsbignn_forward.1} parent=1 // pred_region
      %87 = vsyncadd [#allocation11], 0
      %s88 = sshll.u32 %s5, 4
      %s89 = int_to_ptr.hbm [resolvable:$true] %s88
      %s90 = sshll.u32 [#allocation10], 4
      %s91 = int_to_ptr.vmem [resolvable:$true] %s90
      %96 = dma.hbm_to_vmem [thread:$0]  %s89, 1536, %s91, [#allocation11], 128, 128, 8
    $region25: #{wsbignn_forward.1} parent=1 // pred_fallthru
      _
    // Predicated region
    $region26: #{wsbignn_forward.1} parent=1 // pred_check
      _
    $region27: #{wsbignn_forward.1} parent=1 // pred_check_branch
      %98 = sbr.rel (0) target = $region29
    $region28: #{wsbignn_forward.1} parent=1 // pred_region
      %100 = vsyncadd [#allocation11], 0
      %s102 = sshll.u32 %s6, 4
      %s103 = int_to_ptr.hbm [resolvable:$true] %s102
      %s104 = sshll.u32 [#allocation12], 4
      %s105 = int_to_ptr.vmem [resolvable:$true] %s104
      %107 = dma.hbm_to_vmem [thread:$0]  %s103, 16, %s105, [#allocation11]
    $region29: #{wsbignn_forward.1} parent=1 // pred_fallthru
      _
    // Predicated region
    $region30: #{wsbignn_forward.1} parent=1 // pred_check
      _
    $region31: #{wsbignn_forward.1} parent=1 // pred_check_branch
      %109 = sbr.rel (0) target = $region33
    $region32: #{wsbignn_forward.1} parent=1 // pred_region
      %111 = vsyncadd [#allocation14], 0
      %s112 = sshll.u32 %s7, 4
      %s113 = int_to_ptr.hbm [resolvable:$true] %s112
      %s114 = sshll.u32 [#allocation13], 4
      %s115 = int_to_ptr.vmem [resolvable:$true] %s114
      %120 = dma.hbm_to_vmem [thread:$0]  %s113, 1024, %s115, [#allocation14], 128, 128, 8
    $region33: #{wsbignn_forward.1} parent=1 // pred_fallthru
      _
    // Predicated region
    $region34: #{wsbignn_forward.1} parent=1 // pred_check
      _
    $region35: #{wsbignn_forward.1} parent=1 // pred_check_branch
      %122 = sbr.rel (0) target = $region37
    $region36: #{wsbignn_forward.1} parent=1 // pred_region
      %124 = vsyncadd [#allocation14], 0
      %s125 = sshll.u32 %s8, 4
      %s126 = int_to_ptr.hbm [resolvable:$true] %s125
      %s127 = sshll.u32 [#allocation15], 4
      %s128 = int_to_ptr.vmem [resolvable:$true] %s127
      %133 = dma.hbm_to_vmem [thread:$0]  %s126, 2048, %s128, [#allocation14], 128, 128, 8
    $region37: #{wsbignn_forward.1} parent=1 // pred_fallthru
      _
    // Predicated region
    $region38: #{wsbignn_forward.1} parent=1 // pred_check
      _
    $region39: #{wsbignn_forward.1} parent=1 // pred_check_branch
      %135 = sbr.rel (0) target = $region41
    $region40: #{wsbignn_forward.1} parent=1 // pred_region
      %137 = vsyncadd [#allocation17], 0
      %s139 = sshll.u32 %s9, 4
      %s140 = int_to_ptr.hbm [resolvable:$true] %s139
      %s141 = sshll.u32 [#allocation16], 4
      %s142 = int_to_ptr.vmem [resolvable:$true] %s141
      %144 = dma.hbm_to_vmem [thread:$0]  %s140, 16, %s142, [#allocation17]
    $region41: #{wsbignn_forward.1} parent=1 // pred_fallthru
      _
    // Predicated region
    $region42: #{wsbignn_forward.1} parent=1 // pred_check
      _
    $region43: #{wsbignn_forward.1} parent=1 // pred_check_branch
      %146 = sbr.rel (0) target = $region45
    $region44: #{wsbignn_forward.1} parent=1 // pred_region
      %148 = dma.done [#allocation3], 256
    $region45: #{wsbignn_forward.1} parent=1 // pred_fallthru
      _
    // Predicated region
    $region46: #{wsbignn_forward.1} parent=1 // pred_check
      _
    $region47: #{wsbignn_forward.1} parent=1 // pred_check_branch
      %150 = sbr.rel (0) target = $region49
    $region48: #{wsbignn_forward.1} parent=1 // pred_region
      %152 = dma.done [#allocation5], 128
    $region49: #{wsbignn_forward.1} parent=1 // pred_fallthru
      _
    // Predicated region
    $region50: #{wsbignn_forward.1} parent=1 // pred_check
      _
    $region51: #{wsbignn_forward.1} parent=1 // pred_check_branch
      %154 = sbr.rel (0) target = $region53
    $region52: #{wsbignn_forward.1} parent=1 // pred_region
      %156 = dma.done [#allocation5], 128
    $region53: #{wsbignn_forward.1} parent=1 // pred_fallthru
      _
    // Predicated region
    $region54: #{wsbignn_forward.1} parent=1 // pred_check
      _
    $region55: #{wsbignn_forward.1} parent=1 // pred_check_branch
      %158 = sbr.rel (0) target = $region57
    $region56: #{wsbignn_forward.1} parent=1 // pred_region
      %160 = dma.done [#allocation8], 512
    $region57: #{wsbignn_forward.1} parent=1 // pred_fallthru
      _
    // Predicated region
    $region58: #{wsbignn_forward.1} parent=1 // pred_check
      _
    $region59: #{wsbignn_forward.1} parent=1 // pred_check_branch
      %162 = sbr.rel (0) target = $region61
    $region60: #{wsbignn_forward.1} parent=1 // pred_region
      %164 = dma.done [#allocation8], 512
    $region61: #{wsbignn_forward.1} parent=1 // pred_fallthru
      _
    // Predicated region
    $region62: #{wsbignn_forward.1} parent=1 // pred_check
      _
    $region63: #{wsbignn_forward.1} parent=1 // pred_check_branch
      %166 = sbr.rel (0) target = $region65
    $region64: #{wsbignn_forward.1} parent=1 // pred_region
      %168 = dma.done [#allocation11], 1536
    $region65: #{wsbignn_forward.1} parent=1 // pred_fallthru
      _
    // Predicated region
    $region66: #{wsbignn_forward.1} parent=1 // pred_check
      _
    $region67: #{wsbignn_forward.1} parent=1 // pred_check_branch
      %170 = sbr.rel (0) target = $region69
    $region68: #{wsbignn_forward.1} parent=1 // pred_region
      %172 = dma.done [#allocation11], 16
    $region69: #{wsbignn_forward.1} parent=1 // pred_fallthru
      _
    // Predicated region
    $region70: #{wsbignn_forward.1} parent=1 // pred_check
      _
    $region71: #{wsbignn_forward.1} parent=1 // pred_check_branch
      %174 = sbr.rel (0) target = $region73
    $region72: #{wsbignn_forward.1} parent=1 // pred_region
      %176 = dma.done [#allocation14], 1024
    $region73: #{wsbignn_forward.1} parent=1 // pred_fallthru
      _
    // Predicated region
    $region74: #{wsbignn_forward.1} parent=1 // pred_check
      _
    $region75: #{wsbignn_forward.1} parent=1 // pred_check_branch
      %178 = sbr.rel (0) target = $region77
    $region76: #{wsbignn_forward.1} parent=1 // pred_region
      %180 = dma.done [#allocation14], 2048
    $region77: #{wsbignn_forward.1} parent=1 // pred_fallthru
      _
    // Predicated region
    $region78: #{wsbignn_forward.1} parent=1 // pred_check
      _
    $region79: #{wsbignn_forward.1} parent=1 // pred_check_branch
      %182 = sbr.rel (0) target = $region81
    $region80: #{wsbignn_forward.1} parent=1 // pred_region
      %184 = dma.done [#allocation17], 16
    $region81: #{wsbignn_forward.1} parent=1 // pred_fallthru
      _
    %v185 = vld [vmem:[#allocation2] sm:$0xff]
    %v186 = vld [vmem:[#allocation2 + $0x8] sm:$0xff]
    %v187 = vld [vmem:[#allocation4] sm:$0xff]
    %v188 = vld [vmem:[#allocation6] sm:$0xff]
    %v189 = vld [vmem:[#allocation7] sm:$0xff]
    %v190 = vld [vmem:[#allocation7 + $0x8] sm:$0xff]
    %v191 = vld [vmem:[#allocation7 + $0x10] sm:$0xff]
    %v192 = vld [vmem:[#allocation7 + $0x18] sm:$0xff]
    %195 = vrot.lane.b32.xlu0 %v189, 112
    %v196 = vpop.permute.xlu0 %195
    %197 = vrot.lane.b32.xlu0 %v190, 112
    %v198 = vpop.permute.xlu0 %197
    %vm199 = vcmask 64512
    %v200 = vsel %vm199, %v196, 0
    %v202 = vsel %vm199, %v198, 0
    %204 = vmatpush.msra.mxu0 0.0
    %205 = vmatpush.msra.mxu0 0.0
    %206 = vmatpush.msra.mxu0 0.0
    %207 = vmatpush.msra.mxu0 0.0
    %208 = vmatpush.msra.mxu0 0.0
    %209 = vmatpush.msra.mxu0 0.0
    %210 = vmatpush.msra.mxu0 0.0
    %211 = vmatpush.msra.mxu0 0.0
    %212 = vmatpush.msra.mxu0 0.0
    %213 = vmatpush.msra.mxu0 0.0
    %214 = vmatpush.msra.mxu0 0.0
    %215 = vmatpush.msra.mxu0 0.0
    %216 = vmatpush.msra.mxu0 0.0
    %217 = vmatpush.msra.mxu0 0.0
    %218 = vmatpush.msra.mxu0 0.0
    %219 = vmatpush.msra.mxu0 %v187
    %220 = vmatmul.f32.gmra.mxu0 %v200
    %v221 = vpop.f32.mrf.mxu0
    %v222 = vadd.f32 0.0, %v221
    %223 = vmatmul.f32.gmra.mxu0 %v202
    %v224 = vpop.f32.mrf.mxu0
    %v225 = vadd.f32 0.0, %v224
    %226 = vdwg.mxu0
    %227 = vrot.lane.b32.xlu0 %v189, 104
    %v228 = vpop.permute.xlu0 %227
    %229 = vrot.lane.b32.xlu0 %v190, 104
    %v230 = vpop.permute.xlu0 %229
    %v231 = vsel %vm199, %v228, 0
    %v233 = vsel %vm199, %v230, 0
    %235 = vmatpush.msra.mxu0 0.0
    %236 = vmatpush.msra.mxu0 0.0
    %237 = vmatpush.msra.mxu0 0.0
    %238 = vmatpush.msra.mxu0 0.0
    %239 = vmatpush.msra.mxu0 0.0
    %240 = vmatpush.msra.mxu0 0.0
    %241 = vmatpush.msra.mxu0 0.0
    %242 = vmatpush.msra.mxu0 0.0
    %243 = vmatpush.msra.mxu0 0.0
    %244 = vmatpush.msra.mxu0 0.0
    %245 = vmatpush.msra.mxu0 0.0
    %246 = vmatpush.msra.mxu0 0.0
    %247 = vmatpush.msra.mxu0 0.0
    %248 = vmatpush.msra.mxu0 0.0
    %249 = vmatpush.msra.mxu0 0.0
    %250 = vmatpush.msra.mxu0 %v188
    %251 = vmatmul.f32.gmra.mxu0 %v231
    %v252 = vpop.f32.mrf.mxu0
    %v253 = vadd.f32 0.0, %v252
    %254 = vmatmul.f32.gmra.mxu0 %v233
    %v255 = vpop.f32.mrf.mxu0
    %v256 = vadd.f32 0.0, %v255
    %257 = vdwg.mxu0
    %vm258 = vcmask 261120
    %v259 = vsel %vm258, %v187, 0.0
    %v260 = vrot.slane %v259, 4
    %v261 = vadd.f32 %v259, %v260
    %v262 = vrot.slane %v261, 2
    %v263 = vadd.f32 %v261, %v262
    %v264 = vrot.slane %v263, 1
    %v265 = vadd.f32 %v263, %v264
    %v266 = vsel %vm258, %v188, 0.0
    %v267 = vrot.slane %v266, 4
    %v268 = vadd.f32 %v266, %v267
    %v269 = vrot.slane %v268, 2
    %v270 = vadd.f32 %v268, %v269
    %v271 = vrot.slane %v270, 1
    %v272 = vadd.f32 %v270, %v271
    %v273 = vsel %vm258, %v185, 0.0
    %v274 = vsel %vm258, %v186, 0.0
    %v275 = vadd.f32 %v273, %v274
    %v276 = vrot.slane %v275, 4
    %v277 = vadd.f32 %v275, %v276
    %v278 = vrot.slane %v277, 2
    %v279 = vadd.f32 %v277, %v278
    %v280 = vrot.slane %v279, 1
    %v281 = vadd.f32 %v279, %v280
    %v284 = vsel %vm199, %v196, 0.0
    %285 = vadd.xlane.f32.xlu0 %v284
    %v286 = vpop.xlane.xlu0 %285
    %v287 = vsel %vm199, %v198, 0.0
    %288 = vadd.xlane.f32.xlu0 %v287
    %v289 = vpop.xlane.xlu0 %288
    %v290 = vadd.f32 %v286, 0.008
    %v291 = vadd.f32 %v289, 0.008
    %v292 = vrcp.pop %v290
    %v293 = vrcp.pop %v291
    %v296 = vsel %vm199, %v228, 0.0
    %297 = vadd.xlane.f32.xlu0 %v296
    %v298 = vpop.xlane.xlu0 %297
    %v299 = vsel %vm199, %v230, 0.0
    %300 = vadd.xlane.f32.xlu0 %v299
    %v301 = vpop.xlane.xlu0 %300
    %v302 = vadd.f32 %v298, 0.008
    %v303 = vadd.f32 %v301, 0.008
    %v304 = vrcp.pop %v302
    %v305 = vrcp.pop %v303
    %vm306 = vcmask 130048
    %v307 = vsel %vm306, %v191, 0.0
    %308 = vadd.xlane.f32.xlu0 %v307
    %v309 = vpop.xlane.xlu0 %308
    %v310 = vadd.f32 %v309, 0.016
    %v311 = vrcp.pop %v310
    %v312 = vsel %vm306, %v192, 0.0
    %313 = vadd.xlane.f32.xlu0 %v312
    %v314 = vpop.xlane.xlu0 %313
    %v315 = vadd.f32 %v314, 0.016
    %v316 = vrcp.pop %v315
    %v317 = vmul.f32 %v265, 0.001
    %v318 = vadd.f32 %v222, %v317
    %v319 = vadd.f32 %v225, %v317
    %v320 = vmul.f32 %v318, %v292
    %v321 = vmul.f32 %v319, %v293
    %v322 = vmul.f32 %v272, 0.001
    %v323 = vadd.f32 %v253, %v322
    %v324 = vadd.f32 %v256, %v322
    %v325 = vmul.f32 %v323, %v304
    %v326 = vmul.f32 %v324, %v305
    %v327 = vmul.f32 %v281, 0.001
    %v329 = vsel %vm306, %v191, 0
    %331 = vmatpush.msra.mxu0 0.0
    %332 = vmatpush.msra.mxu0 0.0
    %333 = vmatpush.msra.mxu0 0.0
    %334 = vmatpush.msra.mxu0 0.0
    %335 = vmatpush.msra.mxu0 0.0
    %336 = vmatpush.msra.mxu0 0.0
    %337 = vmatpush.msra.mxu0 0.0
    %338 = vmatpush.msra.mxu0 0.0
    %339 = vmatpush.msra.mxu0 0.0
    %340 = vmatpush.msra.mxu0 0.0
    %341 = vmatpush.msra.mxu0 0.0
    %342 = vmatpush.msra.mxu0 0.0
    %343 = vmatpush.msra.mxu0 0.0
    %344 = vmatpush.msra.mxu0 0.0
    %345 = vmatpush.msra.mxu0 %v186
    %346 = vmatpush.msra.mxu0 %v185
    %347 = vmatmul.f32.gmra.mxu0 %v329
    %v348 = vpop.f32.mrf.mxu0
    %v349 = vadd.f32 %v327, %v348
    %350 = vdwg.mxu0
    %v351 = vmul.f32 %v349, %v311
    %v353 = vsel %vm306, %v192, 0
    %355 = vmatpush.msra.mxu0 0.0
    %356 = vmatpush.msra.mxu0 0.0
    %357 = vmatpush.msra.mxu0 0.0
    %358 = vmatpush.msra.mxu0 0.0
    %359 = vmatpush.msra.mxu0 0.0
    %360 = vmatpush.msra.mxu0 0.0
    %361 = vmatpush.msra.mxu0 0.0
    %362 = vmatpush.msra.mxu0 0.0
    %363 = vmatpush.msra.mxu0 0.0
    %364 = vmatpush.msra.mxu0 0.0
    %365 = vmatpush.msra.mxu0 0.0
    %366 = vmatpush.msra.mxu0 0.0
    %367 = vmatpush.msra.mxu0 0.0
    %368 = vmatpush.msra.mxu0 0.0
    %369 = vmatpush.msra.mxu0 %v186
    %370 = vmatpush.msra.mxu0 %v185
    %371 = vmatmul.f32.gmra.mxu0 %v353
    %v372 = vpop.f32.mrf.mxu0
    %v373 = vadd.f32 %v327, %v372
    %374 = vdwg.mxu0
    %v375 = vmul.f32 %v373, %v316
    %376 = vmatpush.msra.mxu0 0.0
    %377 = vmatpush.msra.mxu0 0.0
    %378 = vmatpush.msra.mxu0 0.0
    %379 = vmatpush.msra.mxu0 0.0
    %380 = vmatpush.msra.mxu0 0.0
    %381 = vmatpush.msra.mxu0 0.0
    %382 = vmatpush.msra.mxu0 0.0
    %383 = vmatpush.msra.mxu0 0.0
    %384 = vmatpush.msra.mxu0 0.0
    %385 = vmatpush.msra.mxu0 0.0
    %386 = vmatpush.msra.mxu0 0.0
    %387 = vmatpush.msra.mxu0 0.0
    %388 = vmatpush.msra.mxu0 0.0
    %389 = vmatpush.msra.mxu0 0.0
    %390 = vmatpush.msra.mxu0 %v225
    %391 = vmatpush.msra.mxu0 %v222
    %392 = vmatmul.f32.gmra.mxu0 %v329
    %v393 = vpop.f32.mrf.mxu0
    %v394 = vadd.f32 0.0, %v393
    %395 = vdwg.mxu0
    %396 = vmatpush.msra.mxu0 0.0
    %397 = vmatpush.msra.mxu0 0.0
    %398 = vmatpush.msra.mxu0 0.0
    %399 = vmatpush.msra.mxu0 0.0
    %400 = vmatpush.msra.mxu0 0.0
    %401 = vmatpush.msra.mxu0 0.0
    %402 = vmatpush.msra.mxu0 0.0
    %403 = vmatpush.msra.mxu0 0.0
    %404 = vmatpush.msra.mxu0 0.0
    %405 = vmatpush.msra.mxu0 0.0
    %406 = vmatpush.msra.mxu0 0.0
    %407 = vmatpush.msra.mxu0 0.0
    %408 = vmatpush.msra.mxu0 0.0
    %409 = vmatpush.msra.mxu0 0.0
    %410 = vmatpush.msra.mxu0 %v256
    %411 = vmatpush.msra.mxu0 %v253
    %412 = vmatmul.f32.gmra.mxu0 %v353
    %v413 = vpop.f32.mrf.mxu0
    %v414 = vadd.f32 0.0, %v413
    %415 = vdwg.mxu0
    %416 = vmatpush.msra.mxu0 0.0
    %417 = vmatpush.msra.mxu0 0.0
    %418 = vmatpush.msra.mxu0 0.0
    %419 = vmatpush.msra.mxu0 0.0
    %420 = vmatpush.msra.mxu0 0.0
    %421 = vmatpush.msra.mxu0 0.0
    %422 = vmatpush.msra.mxu0 0.0
    %423 = vmatpush.msra.mxu0 0.0
    %424 = vmatpush.msra.mxu0 0.0
    %425 = vmatpush.msra.mxu0 0.0
    %426 = vmatpush.msra.mxu0 0.0
    %427 = vmatpush.msra.mxu0 0.0
    %428 = vmatpush.msra.mxu0 0.0
    %429 = vmatpush.msra.mxu0 0.0
    %430 = vmatpush.msra.mxu0 0.0
    %431 = vmatpush.msra.mxu0 %v191
    %432 = vmatmul.f32.gmra.mxu0 %v200
    %v433 = vpop.f32.mrf.mxu0
    %v434 = vadd.f32 0.0, %v433
    %435 = vmatmul.f32.gmra.mxu0 %v202
    %v436 = vpop.f32.mrf.mxu0
    %v437 = vadd.f32 0.0, %v436
    %438 = vdwg.mxu0
    %439 = vmatpush.msra.mxu0 0.0
    %440 = vmatpush.msra.mxu0 0.0
    %441 = vmatpush.msra.mxu0 0.0
    %442 = vmatpush.msra.mxu0 0.0
    %443 = vmatpush.msra.mxu0 0.0
    %444 = vmatpush.msra.mxu0 0.0
    %445 = vmatpush.msra.mxu0 0.0
    %446 = vmatpush.msra.mxu0 0.0
    %447 = vmatpush.msra.mxu0 0.0
    %448 = vmatpush.msra.mxu0 0.0
    %449 = vmatpush.msra.mxu0 0.0
    %450 = vmatpush.msra.mxu0 0.0
    %451 = vmatpush.msra.mxu0 0.0
    %452 = vmatpush.msra.mxu0 0.0
    %453 = vmatpush.msra.mxu0 0.0
    %454 = vmatpush.msra.mxu0 %v192
    %455 = vmatmul.f32.gmra.mxu0 %v231
    %v456 = vpop.f32.mrf.mxu0
    %v457 = vadd.f32 0.0, %v456
    %458 = vmatmul.f32.gmra.mxu0 %v233
    %v459 = vpop.f32.mrf.mxu0
    %v460 = vadd.f32 0.0, %v459
    %461 = vdwg.mxu0
    %v462 = vadd.f32 %v434, %v457
    %v463 = vadd.f32 %v437, %v460
    %v464 = vmul.f32 %v434, %v457
    %v465 = vmul.f32 %v437, %v460
    %v466 = vsub.f32 %v462, %v464
    %v467 = vsub.f32 %v463, %v465
    %v469 = vsel %vm306, %v466, 0
    %v472 = vsel %vm306, %v467, 0
    %474 = vmatpush.msra.mxu0 0.0
    %475 = vmatpush.msra.mxu0 0.0
    %476 = vmatpush.msra.mxu0 0.0
    %477 = vmatpush.msra.mxu0 0.0
    %478 = vmatpush.msra.mxu0 0.0
    %479 = vmatpush.msra.mxu0 0.0
    %480 = vmatpush.msra.mxu0 0.0
    %481 = vmatpush.msra.mxu0 0.0
    %482 = vmatpush.msra.mxu0 0.0
    %483 = vmatpush.msra.mxu0 0.0
    %484 = vmatpush.msra.mxu0 0.0
    %485 = vmatpush.msra.mxu0 0.0
    %486 = vmatpush.msra.mxu0 0.0
    %487 = vmatpush.msra.mxu0 0.0
    %488 = vmatpush.msra.mxu0 %v186
    %489 = vmatpush.msra.mxu0 %v185
    %490 = vmatmul.f32.gmra.mxu0 %v469
    %v491 = vpop.f32.mrf.mxu0
    %v492 = vadd.f32 0.0, %v491
    %493 = vmatmul.f32.gmra.mxu0 %v472
    %v494 = vpop.f32.mrf.mxu0
    %v495 = vadd.f32 0.0, %v494
    %496 = vdwg.mxu0
    %499 = vrot.lane.b32.xlu0 %v325, 32
    %v500 = vpop.permute.xlu0 %499
    %501 = vrot.lane.b32.xlu0 %v326, 32
    %v502 = vpop.permute.xlu0 %501
    %507 = vrot.lane.b32.xlu0 %v492, 64
    %v508 = vpop.permute.xlu0 %507
    %509 = vrot.lane.b32.xlu0 %v495, 64
    %v510 = vpop.permute.xlu0 %509
    %v513 = vsel %vm258, %v320, %v500
    %v514 = vsel %vm258, %v321, %v502
    %vm515 = vcmask 523264
    %v516 = vsel %vm515, %v513, %v508
    %v517 = vsel %vm515, %v514, %v510
    %v518 = vld [vmem:[#allocation9] sm:$0xff]
    %v519 = vld [vmem:[#allocation9 + $0x8] sm:$0xff]
    %v520 = vld [vmem:[#allocation9 + $0x10] sm:$0xff]
    %v521 = vld [vmem:[#allocation9 + $0x18] sm:$0xff]
    %v522 = vld [vmem:[#allocation10] sm:$0xff]
    %v523 = vld [vmem:[#allocation10 + $0x8] sm:$0xff]
    %v524 = vld [vmem:[#allocation10 + $0x10] sm:$0xff]
    %v525 = vld [vmem:[#allocation10 + $0x18] sm:$0xff]
    %v526 = vld [vmem:[#allocation10 + $0x20] sm:$0xff]
    %v527 = vld [vmem:[#allocation10 + $0x28] sm:$0xff]
    %v528 = vld [vmem:[#allocation10 + $0x30] sm:$0xff]
    %v529 = vld [vmem:[#allocation10 + $0x38] sm:$0xff]
    %v530 = vld [vmem:[#allocation10 + $0x40] sm:$0xff]
    %v531 = vld [vmem:[#allocation10 + $0x48] sm:$0xff]
    %v532 = vld [vmem:[#allocation10 + $0x50] sm:$0xff]
    %v533 = vld [vmem:[#allocation10 + $0x58] sm:$0xff]
    %vm534 = vcmask 785408
    %v536 = vsel %vm534, %v516, 0
    %v539 = vsel %vm534, %v517, 0
    %541 = vmatpush.msra.mxu0 0.0
    %542 = vmatpush.msra.mxu0 0.0
    %543 = vmatpush.msra.mxu0 0.0
    %544 = vmatpush.msra.mxu0 0.0
    %545 = vmatpush.msra.mxu0 %v533
    %546 = vmatpush.msra.mxu0 %v532
    %547 = vmatpush.msra.mxu0 %v531
    %548 = vmatpush.msra.mxu0 %v530
    %549 = vmatpush.msra.mxu0 %v529
    %550 = vmatpush.msra.mxu0 %v528
    %551 = vmatpush.msra.mxu0 %v527
    %552 = vmatpush.msra.mxu0 %v526
    %553 = vmatpush.msra.mxu0 %v525
    %554 = vmatpush.msra.mxu0 %v524
    %555 = vmatpush.msra.mxu0 %v523
    %556 = vmatpush.msra.mxu0 %v522
    %557 = vmatmul.f32.gmra.mxu0 %v536
    %v558 = vpop.f32.mrf.mxu0
    %v559 = vadd.f32 0.0, %v558
    %560 = vmatmul.f32.gmra.mxu0 %v539
    %v561 = vpop.f32.mrf.mxu0
    %v562 = vadd.f32 0.0, %v561
    %563 = vdwg.mxu0
    %v565 = vsel %vm258, %v185, 0
    %v568 = vsel %vm258, %v186, 0
    %570 = vmatpush.msra.mxu0 0.0
    %571 = vmatpush.msra.mxu0 0.0
    %572 = vmatpush.msra.mxu0 0.0
    %573 = vmatpush.msra.mxu0 0.0
    %574 = vmatpush.msra.mxu0 0.0
    %575 = vmatpush.msra.mxu0 0.0
    %576 = vmatpush.msra.mxu0 0.0
    %577 = vmatpush.msra.mxu0 0.0
    %578 = vmatpush.msra.mxu0 0.0
    %579 = vmatpush.msra.mxu0 0.0
    %580 = vmatpush.msra.mxu0 0.0
    %581 = vmatpush.msra.mxu0 0.0
    %582 = vmatpush.msra.mxu0 %v521
    %583 = vmatpush.msra.mxu0 %v520
    %584 = vmatpush.msra.mxu0 %v519
    %585 = vmatpush.msra.mxu0 %v518
    %586 = vmatmul.f32.gmra.mxu0 %v565
    %v587 = vpop.f32.mrf.mxu0
    %v588 = vadd.f32 %v559, %v587
    %589 = vmatmul.f32.gmra.mxu0 %v568
    %v590 = vpop.f32.mrf.mxu0
    %v591 = vadd.f32 %v562, %v590
    %592 = vdwg.mxu0
    %v593 = vld [vmem:[#allocation12] sm:$0x1]
    %v595 = vperm.slane %v593, 0
    %v597 = vadd.f32 %v588, %v595
    %v598 = vadd.f32 %v591, %v595
    %v599 = vxor.u32 %v597, 2147483648
    %v600 = vxor.u32 %v598, 2147483648
    %v601 = vmul.f32 %v599, 1.442695
    %v602 = vpow.pop %v601
    %v603 = vmul.f32 %v600, 1.442695
    %v604 = vpow.pop %v603
    %v605 = vadd.f32 %v602, 1.0
    %v606 = vadd.f32 %v604, 1.0
    %v607 = vrcp.pop %v605
    %v608 = vmul.f32 %v605, %v607
    %v609 = vsub.f32 1.0, %v608
    %v610 = vmul.f32 %v607, %v609
    %v611 = vadd.f32 %v607, %v610
    %vm612 = vweird.f32 %v605
    %vm613 = vweird.f32 %v607
    %vm614 = vmor %vm612, %vm613
    %v615 = vsel %vm614, %v607, %v611
    %v616 = vand.u32 2147483647, %v605
    %vm617 = vcmp.eq.f32.partialorder %v616, 8.507059e+37
    %v618 = vand.u32 %v605, 2147483648
    %v619 = vor.u32 1.1754944e-38, %v618
    %v620 = vsel %vm617, %v619, %v615
    %v621 = vmul.f32 1.0, %v620
    %v622 = vrcp.pop %v606
    %v623 = vmul.f32 %v606, %v622
    %v624 = vsub.f32 1.0, %v623
    %v625 = vmul.f32 %v622, %v624
    %v626 = vadd.f32 %v622, %v625
    %vm627 = vweird.f32 %v606
    %vm628 = vweird.f32 %v622
    %vm629 = vmor %vm627, %vm628
    %v630 = vsel %vm629, %v622, %v626
    %v631 = vand.u32 2147483647, %v606
    %vm632 = vcmp.eq.f32.partialorder %v631, 8.507059e+37
    %v633 = vand.u32 %v606, 2147483648
    %v634 = vor.u32 1.1754944e-38, %v633
    %v635 = vsel %vm632, %v634, %v630
    %v636 = vmul.f32 1.0, %v635
    %639 = vrot.lane.b32.xlu0 %v621, 96
    %v640 = vpop.permute.xlu0 %639
    %641 = vrot.lane.b32.xlu0 %v636, 96
    %v642 = vpop.permute.xlu0 %641
    %v645 = vadd.f32 %v621, %v640
    %v646 = vadd.f32 %v636, %v642
    %v647 = vmul.f32 %v645, 0.5
    %v648 = vmul.f32 %v646, 0.5
    %649 = vrot.lane.b32.xlu0 %v621, 32
    %v650 = vpop.permute.xlu0 %649
    %651 = vrot.lane.b32.xlu0 %v636, 32
    %v652 = vpop.permute.xlu0 %651
    %v655 = vsel %vm258, %v647, %v650
    %v656 = vsel %vm258, %v648, %v652
    %657 = vst [vmem:[%s10] sm:$0xff] %v655
    %658 = vst [vmem:[%s10 + $0x8] sm:$0xff] %v656
    %660 = vrot.lane.b32.xlu0 %v188, 32
    %v661 = vpop.permute.xlu0 %660
    %v663 = vsel %vm258, %v187, %v661
    %665 = vrot.lane.b32.xlu0 %v394, 32
    %v666 = vpop.permute.xlu0 %665
    %669 = vrot.lane.b32.xlu0 %v375, 64
    %v670 = vpop.permute.xlu0 %669
    %673 = vrot.lane.b32.xlu0 %v414, 96
    %v674 = vpop.permute.xlu0 %673
    %v676 = vsel %vm258, %v351, %v666
    %v677 = vsel %vm515, %v676, %v670
    %v678 = vsel %vm534, %v677, %v674
    %v679 = vld [vmem:[#allocation13] sm:$0xff]
    %v680 = vld [vmem:[#allocation13 + $0x8] sm:$0xff]
    %v681 = vld [vmem:[#allocation13 + $0x10] sm:$0xff]
    %v682 = vld [vmem:[#allocation13 + $0x18] sm:$0xff]
    %v683 = vld [vmem:[#allocation13 + $0x20] sm:$0xff]
    %v684 = vld [vmem:[#allocation13 + $0x28] sm:$0xff]
    %v685 = vld [vmem:[#allocation13 + $0x30] sm:$0xff]
    %v686 = vld [vmem:[#allocation13 + $0x38] sm:$0xff]
    %v687 = vld [vmem:[#allocation15] sm:$0xff]
    %v688 = vld [vmem:[#allocation15 + $0x8] sm:$0xff]
    %v689 = vld [vmem:[#allocation15 + $0x10] sm:$0xff]
    %v690 = vld [vmem:[#allocation15 + $0x18] sm:$0xff]
    %v691 = vld [vmem:[#allocation15 + $0x20] sm:$0xff]
    %v692 = vld [vmem:[#allocation15 + $0x28] sm:$0xff]
    %v693 = vld [vmem:[#allocation15 + $0x30] sm:$0xff]
    %v694 = vld [vmem:[#allocation15 + $0x38] sm:$0xff]
    %v695 = vld [vmem:[#allocation15 + $0x40] sm:$0xff]
    %v696 = vld [vmem:[#allocation15 + $0x48] sm:$0xff]
    %v697 = vld [vmem:[#allocation15 + $0x50] sm:$0xff]
    %v698 = vld [vmem:[#allocation15 + $0x58] sm:$0xff]
    %v699 = vld [vmem:[#allocation15 + $0x60] sm:$0xff]
    %v700 = vld [vmem:[#allocation15 + $0x68] sm:$0xff]
    %v701 = vld [vmem:[#allocation15 + $0x70] sm:$0xff]
    %v702 = vld [vmem:[#allocation15 + $0x78] sm:$0xff]
    %703 = vmatpush.msra.mxu0 %v702
    %704 = vmatpush.msra.mxu0 %v701
    %705 = vmatpush.msra.mxu0 %v700
    %706 = vmatpush.msra.mxu0 %v699
    %707 = vmatpush.msra.mxu0 %v698
    %708 = vmatpush.msra.mxu0 %v697
    %709 = vmatpush.msra.mxu0 %v696
    %710 = vmatpush.msra.mxu0 %v695
    %711 = vmatpush.msra.mxu0 %v694
    %712 = vmatpush.msra.mxu0 %v693
    %713 = vmatpush.msra.mxu0 %v692
    %714 = vmatpush.msra.mxu0 %v691
    %715 = vmatpush.msra.mxu0 %v690
    %716 = vmatpush.msra.mxu0 %v689
    %717 = vmatpush.msra.mxu0 %v688
    %718 = vmatpush.msra.mxu0 %v687
    %719 = vmatmul.f32.gmra.mxu0 %v678
    %v720 = vpop.f32.mrf.mxu0
    %v721 = vadd.f32 0.0, %v720
    %722 = vdwg.mxu0
    %v724 = vsel %vm515, %v663, 0
    %726 = vmatpush.msra.mxu0 0.0
    %727 = vmatpush.msra.mxu0 0.0
    %728 = vmatpush.msra.mxu0 0.0
    %729 = vmatpush.msra.mxu0 0.0
    %730 = vmatpush.msra.mxu0 0.0
    %731 = vmatpush.msra.mxu0 0.0
    %732 = vmatpush.msra.mxu0 0.0
    %733 = vmatpush.msra.mxu0 0.0
    %734 = vmatpush.msra.mxu0 %v686
    %735 = vmatpush.msra.mxu0 %v685
    %736 = vmatpush.msra.mxu0 %v684
    %737 = vmatpush.msra.mxu0 %v683
    %738 = vmatpush.msra.mxu0 %v682
    %739 = vmatpush.msra.mxu0 %v681
    %740 = vmatpush.msra.mxu0 %v680
    %741 = vmatpush.msra.mxu0 %v679
    %742 = vmatmul.f32.gmra.mxu0 %v724
    %v743 = vpop.f32.mrf.mxu0
    %v744 = vadd.f32 %v721, %v743
    %745 = vdwg.mxu0
    %v746 = vld [vmem:[#allocation16] sm:$0x1]
    %v748 = vperm.slane %v746, 0
    %v750 = vadd.f32 %v744, %v748
    %v751 = vxor.u32 %v750, 2147483648
    %v752 = vmul.f32 %v751, 1.442695
    %v753 = vpow.pop %v752
    %v754 = vadd.f32 %v753, 1.0
    %v755 = vrcp.pop %v754
    %v756 = vmul.f32 %v754, %v755
    %v757 = vsub.f32 1.0, %v756
    %v758 = vmul.f32 %v755, %v757
    %v759 = vadd.f32 %v755, %v758
    %vm760 = vweird.f32 %v754
    %vm761 = vweird.f32 %v755
    %vm762 = vmor %vm760, %vm761
    %v763 = vsel %vm762, %v755, %v759
    %v764 = vand.u32 2147483647, %v754
    %vm765 = vcmp.eq.f32.partialorder %v764, 8.507059e+37
    %v766 = vand.u32 %v754, 2147483648
    %v767 = vor.u32 1.1754944e-38, %v766
    %v768 = vsel %vm765, %v767, %v763
    %v769 = vmul.f32 1.0, %v768
    %770 = vst [vmem:[%s11] sm:$0xff] %v769
    // Predicated region
    $region82: #{wsbignn_forward.1} parent=1 // pred_check
      _
    $region83: #{wsbignn_forward.1} parent=1 // pred_check_branch
      %772 = sbr.rel (0) target = $region85
    $region84: #{wsbignn_forward.1} parent=1 // pred_region
      _
    $region85: #{wsbignn_forward.1} parent=1 // pred_fallthru
      _
    // Predicated region
    $region86: #{wsbignn_forward.1} parent=1 // pred_check
      _
    $region87: #{wsbignn_forward.1} parent=1 // pred_check_branch
      %774 = sbr.rel (0) target = $region89
    $region88: #{wsbignn_forward.1} parent=1 // pred_region
      _
    $region89: #{wsbignn_forward.1} parent=1 // pred_fallthru
      _
    // Predicated region
    $region90: #{wsbignn_forward.1} parent=1 // pred_check
      _
    $region91: #{wsbignn_forward.1} parent=1 // pred_check_branch
      %776 = sbr.rel (0) target = $region93
    $region92: #{wsbignn_forward.1} parent=1 // pred_region
      _
    $region93: #{wsbignn_forward.1} parent=1 // pred_fallthru
      _
    // Predicated region
    $region94: #{wsbignn_forward.1} parent=1 // pred_check
      _
    $region95: #{wsbignn_forward.1} parent=1 // pred_check_branch
      %778 = sbr.rel (0) target = $region97
    $region96: #{wsbignn_forward.1} parent=1 // pred_region
      _
    $region97: #{wsbignn_forward.1} parent=1 // pred_fallthru
      _
    %779 = vsyncpa [#allocation3], 1
    %780 = vsyncpa [#allocation5], 1
    %781 = vsyncpa [#allocation8], 1
    %782 = vsyncpa [#allocation11], 1
    %783 = vsyncpa [#allocation14], 1
    %784 = vsyncpa [#allocation17], 1

</llo_original>
